<compile_context>
chip_gen: v7x
topology: tpu7x:2x2x1
jax: 0.10.0
libtpu: 0.0.40
codegen_flags: <defaults>
</compile_context>

<pallas_src>
import jax
import jax.numpy as jnp
from jax import lax
from jax.experimental import pallas as pl
from jax.experimental.pallas import tpu as pltpu

OUT_PAD = 128  # lane-dense padding for the dense-head output columns


def rnn_fused_kernel(x_ref, wih_ref, whh_ref, wd_ref, bias_ref,
                     out_ref, hN_ref, xp_ref, y_ref):
    """Whole-sequence fused RNN + dense head in a single invocation.

    x_ref    : (S*BP, I)   time-major flattened, batch-padded input
    wih_ref  : (I, H)      W_ih^T
    whh_ref  : (H, H)      W_hh^T
    wd_ref   : (H, OP)     W_dense^T zero-padded to OP=128 lanes
    bias_ref : (2, OP)     row 0: (b_ih+b_hh) padded; row 1: b_dense padded
    out_ref  : (S*BP, OP)  dense(Y.reshape(-1, H)), lane-dense padded output slab
    hN_ref   : (BP, H)     final hidden state (padded batch)
    xp_ref   : (S*BP, H)   VMEM scratch: hoisted input projection
    y_ref    : (S*BP, H)   VMEM scratch: per-step hidden-state writebacks
    """
    SBP = x_ref.shape[0]
    BP, H = hN_ref.shape
    S = SBP // BP

    bias = bias_ref[...]            # (2, OP)
    b_rnn = bias[0:1, :H]           # (1, H)
    b_dense = bias[1:2, :]          # (1, OP)

    # (1) Hoisted input projection: no sequential dependency -> one batched matmul.
    xp_ref[...] = (
        jnp.dot(x_ref[...], wih_ref[...], preferred_element_type=jnp.float32)
        + b_rnn
    )

    # (2) Serial recurrence, fully unrolled (S is a small static constant).
    #     BP is a multiple of 8, so every t*BP row offset is sublane-aligned.
    #     Xp reads and h writes hit different scratch buffers (no false VMEM dep).
    h = jnp.zeros((BP, H), jnp.float32)
    for t in range(S):
        xp_t = xp_ref[pl.ds(t * BP, BP), :]
        h = jnp.tanh(
            xp_t + jnp.dot(h, whh_ref[...], preferred_element_type=jnp.float32)
        )
        y_ref[pl.ds(t * BP, BP), :] = h

    # (3) Final hidden state written exactly once.
    hN_ref[...] = h

    # (4) Dense head applied once on the full (S*BP, H) slab -> lane-dense store.
    #     (Dropout is identity in eval mode.)
    out_ref[...] = (
        jnp.dot(y_ref[...], wd_ref[...], preferred_element_type=jnp.float32)
        + b_dense
    ).astype(out_ref.dtype)


def prepare_params(params):
    """One-time parameter preparation (transposes, bias fold, lane padding).

    Done at init so the steady-state forward path has zero wrapper-side weight ops.
    """
    H = params["w_hh"].shape[0]
    O = params["w_dense"].shape[0]
    assert H <= OUT_PAD and O <= OUT_PAD

    wihT = jnp.asarray(params["w_ih"].T, jnp.float32)                 # (I, H)
    whhT = jnp.asarray(params["w_hh"].T, jnp.float32)                 # (H, H)
    wd_pad = jnp.zeros((H, OUT_PAD), jnp.float32).at[:, :O].set(
        params["w_dense"].T)                                          # (H, OP)
    bias2 = (jnp.zeros((2, OUT_PAD), jnp.float32)
             .at[0, :H].set(params["b_ih"] + params["b_hh"])
             .at[1, :O].set(params["b_dense"]))                       # (2, OP)
    return {"wihT": wihT, "whhT": whhT, "wd_pad": wd_pad, "bias2": bias2,
            "H": H, "O": O}


def rnn_forward(x, prep):
    """x: (seq_len, batch, input_size) float32, prep: output of prepare_params.

    Returns (output, state):
      output: (seq_len*batch, output_dim)   -- matches Y.reshape(-1, H) -> dense
      state : (1, batch, hidden_size)       -- final hidden state (nn.RNN convention)
    """
    S, B, I = x.shape
    H, O = prep["H"], prep["O"]
    OP = OUT_PAD

    # Pad batch up to a full sublane tile so every per-timestep row block in the
    # kernel is an aligned, unmasked (BP, H) access.
    BP = ((B + 7) // 8) * 8
    x_pad = jnp.pad(x, ((0, 0), (0, BP - B), (0, 0)))     # (S, BP, I)
    x2 = x_pad.reshape(S * BP, I)

    out_pad, h_pad = pl.pallas_call(
        rnn_fused_kernel,
        out_shape=(
            jax.ShapeDtypeStruct((S * BP, OP), jnp.float32),   # lane-dense output slab
            jax.ShapeDtypeStruct((BP, H), jnp.float32),        # final hidden (padded)
        ),
        # No grid: single invocation, everything (a few tens of KiB) resident in VMEM.
        scratch_shapes=[
            pltpu.VMEM((S * BP, H), jnp.float32),   # Xp (input projection)
            pltpu.VMEM((S * BP, H), jnp.float32),   # Y  (hidden-state writebacks)
        ],
    )(x2, prep["wihT"], prep["whhT"], prep["wd_pad"], prep["bias2"])

    # Compact padded batch rows and padded output lanes in one slice.
    out = out_pad.reshape(S, BP, OP)[:, :B, :O].reshape(S * B, O)
    state = h_pad[:B][None]                 # (1, B, H), PyTorch nn.RNN h_n convention
    return out, state


def rnn_forward_ref(x, params):
    """Pure-JAX reference (lax.scan) for correctness checking."""
    wihT = params["w_ih"].T
    whhT = params["w_hh"].T
    b = params["b_ih"] + params["b_hh"]

    def step(h, x_t):
        h_new = jnp.tanh(x_t @ wihT + h @ whhT + b)
        return h_new, h_new

    B = x.shape[1]
    H = params["w_hh"].shape[0]
    h0 = jnp.zeros((B, H), jnp.float32)
    h_final, Y = lax.scan(step, h0, x)                 # Y: (S, B, H)
    Yf = Y.reshape(-1, H)
    out = Yf @ params["w_dense"].T + params["b_dense"]
    return out, h_final[None]


def init_params(key, input_size, hidden_size, output_dim):
    """Deterministic init mimicking PyTorch's U(-1/sqrt(H), 1/sqrt(H))."""
    ks = jax.random.split(key, 6)
    kH = 1.0 / jnp.sqrt(hidden_size)
    kO = 1.0 / jnp.sqrt(hidden_size)
    u = lambda k, shape, s: jax.random.uniform(k, shape, jnp.float32, -s, s)
    return {
        "w_ih": u(ks[0], (hidden_size, input_size), kH),
        "w_hh": u(ks[1], (hidden_size, hidden_size), kH),
        "b_ih": u(ks[2], (hidden_size,), kH),
        "b_hh": u(ks[3], (hidden_size,), kH),
        "w_dense": u(ks[4], (output_dim, hidden_size), kO),
        "b_dense": u(ks[5], (output_dim,), kO),
    }


if __name__ == "__main__":
    SEQ, BATCH, INPUT, HIDDEN, OUT = 8, 4, 16, 32, 2

    key = jax.random.PRNGKey(0)
    k_x, k_p = jax.random.split(key)
    x = jax.random.normal(k_x, (SEQ, BATCH, INPUT), jnp.float32)
    params = init_params(k_p, INPUT, HIDDEN, OUT)
    prep = prepare_params(params)      # one-time weight prep (init-time, not per call)

    out, state = rnn_forward(x, prep)
    out = jax.block_until_ready(out)
    state = jax.block_until_ready(state)

    out_ref, state_ref = rnn_forward_ref(x, params)
    assert out.shape == (SEQ * BATCH, OUT)
    assert state.shape == (1, BATCH, HIDDEN)
    assert jnp.allclose(out, out_ref, atol=1e-5, rtol=1e-5)
    assert jnp.allclose(state, state_ref, atol=1e-5, rtol=1e-5)

    print("KERNEL_OK")
</pallas_src>

<mosaic_0001>
module attributes {stable_mosaic.version = 11 : i64} {
  func.func @rnn_fused_kernel(%arg0: memref<64x16xf32, #tpu.memory_space<vmem>>, %arg1: memref<16x32xf32, #tpu.memory_space<vmem>>, %arg2: memref<32x32xf32, #tpu.memory_space<vmem>>, %arg3: memref<32x128xf32, #tpu.memory_space<vmem>>, %arg4: memref<2x128xf32, #tpu.memory_space<vmem>>, %arg5: memref<64x128xf32, #tpu.memory_space<vmem>>, %arg6: memref<8x32xf32, #tpu.memory_space<vmem>>, %arg7: memref<64x32xf32, #tpu.memory_space<vmem>>, %arg8: memref<64x32xf32, #tpu.memory_space<vmem>>) attributes {dimension_semantics = [], scalar_prefetch = 0 : i64, scratch_operands = 2 : i64, tpu.core_type = #tpu.core_type<tc>} {
    %c0 = arith.constant 0 : index
    %c0_0 = arith.constant 0 : index
    %0 = vector.load %arg4[%c0, %c0_0] : memref<2x128xf32, #tpu.memory_space<vmem>>, vector<2x128xf32>
    %1 = vector.extract_strided_slice %0 {offsets = [0, 0], sizes = [1, 32], strides = [1, 1]} : vector<2x128xf32> to vector<1x32xf32>
    %2 = vector.extract_strided_slice %0 {offsets = [1, 0], sizes = [1, 128], strides = [1, 1]} : vector<2x128xf32> to vector<1x128xf32>
    %c0_1 = arith.constant 0 : index
    %c0_2 = arith.constant 0 : index
    %3 = vector.load %arg0[%c0_1, %c0_2] : memref<64x16xf32, #tpu.memory_space<vmem>>, vector<64x16xf32>
    %c0_3 = arith.constant 0 : index
    %c0_4 = arith.constant 0 : index
    %4 = vector.load %arg1[%c0_3, %c0_4] : memref<16x32xf32, #tpu.memory_space<vmem>>, vector<16x32xf32>
    %cst = arith.constant dense<0.000000e+00> : vector<64x32xf32>
    %5 = tpu.matmul %3, %4, %cst {dimension_numbers = #tpu.dot_dimension_numbers<[1], [0], [0], [1], [0, 0, 1, 1], [], []>} : vector<64x16xf32>, vector<16x32xf32>, vector<64x32xf32> -> vector<64x32xf32>
    %6 = vector.broadcast %1 : vector<1x32xf32> to vector<64x32xf32>
    %7 = arith.addf %5, %6 : vector<64x32xf32>
    %c0_5 = arith.constant 0 : index
    %c0_6 = arith.constant 0 : index
    %8 = vector.load %arg7[%c0_5, %c0_6] : memref<64x32xf32, #tpu.memory_space<vmem>>, vector<64x32xf32>
    tpu.vector_store %arg7[%c0_5, %c0_6], %7 {strides = array<i32>} : memref<64x32xf32, #tpu.memory_space<vmem>>, vector<64x32xf32>,
    %cst_7 = arith.constant 0.000000e+00 : f32
    %9 = vector.broadcast %cst_7 : f32 to vector<8x32xf32>
    %c0_8 = arith.constant 0 : index
    %c0_9 = arith.constant 0 : index
    %10 = vector.load %arg7[%c0_8, %c0_9] : memref<64x32xf32, #tpu.memory_space<vmem>>, vector<8x32xf32>
    %c0_10 = arith.constant 0 : index
    %c0_11 = arith.constant 0 : index
    %11 = vector.load %arg2[%c0_10, %c0_11] : memref<32x32xf32, #tpu.memory_space<vmem>>, vector<32x32xf32>
    %cst_12 = arith.constant dense<0.000000e+00> : vector<8x32xf32>
    %12 = tpu.matmul %9, %11, %cst_12 {dimension_numbers = #tpu.dot_dimension_numbers<[1], [0], [0], [1], [0, 0, 1, 1], [], []>} : vector<8x32xf32>, vector<32x32xf32>, vector<8x32xf32> -> vector<8x32xf32>
    %13 = arith.addf %10, %12 : vector<8x32xf32>
    %14 = math.tanh %13 : vector<8x32xf32>
    %c0_13 = arith.constant 0 : index
    %c0_14 = arith.constant 0 : index
    %15 = vector.load %arg8[%c0_13, %c0_14] : memref<64x32xf32, #tpu.memory_space<vmem>>, vector<8x32xf32>
    tpu.vector_store %arg8[%c0_13, %c0_14], %14 {strides = array<i32>} : memref<64x32xf32, #tpu.memory_space<vmem>>, vector<8x32xf32>,
    %c8 = arith.constant 8 : index
    %c0_15 = arith.constant 0 : index
    %16 = vector.load %arg7[%c8, %c0_15] : memref<64x32xf32, #tpu.memory_space<vmem>>, vector<8x32xf32>
    %c0_16 = arith.constant 0 : index
    %c0_17 = arith.constant 0 : index
    %17 = vector.load %arg2[%c0_16, %c0_17] : memref<32x32xf32, #tpu.memory_space<vmem>>, vector<32x32xf32>
    %cst_18 = arith.constant dense<0.000000e+00> : vector<8x32xf32>
    %18 = tpu.matmul %14, %17, %cst_18 {dimension_numbers = #tpu.dot_dimension_numbers<[1], [0], [0], [1], [0, 0, 1, 1], [], []>} : vector<8x32xf32>, vector<32x32xf32>, vector<8x32xf32> -> vector<8x32xf32>
    %19 = arith.addf %16, %18 : vector<8x32xf32>
    %20 = math.tanh %19 : vector<8x32xf32>
    %c8_19 = arith.constant 8 : index
    %c0_20 = arith.constant 0 : index
    %21 = vector.load %arg8[%c8_19, %c0_20] : memref<64x32xf32, #tpu.memory_space<vmem>>, vector<8x32xf32>
    tpu.vector_store %arg8[%c8_19, %c0_20], %20 {strides = array<i32>} : memref<64x32xf32, #tpu.memory_space<vmem>>, vector<8x32xf32>,
    %c16 = arith.constant 16 : index
    %c0_21 = arith.constant 0 : index
    %22 = vector.load %arg7[%c16, %c0_21] : memref<64x32xf32, #tpu.memory_space<vmem>>, vector<8x32xf32>
    %c0_22 = arith.constant 0 : index
    %c0_23 = arith.constant 0 : index
    %23 = vector.load %arg2[%c0_22, %c0_23] : memref<32x32xf32, #tpu.memory_space<vmem>>, vector<32x32xf32>
    %cst_24 = arith.constant dense<0.000000e+00> : vector<8x32xf32>
    %24 = tpu.matmul %20, %23, %cst_24 {dimension_numbers = #tpu.dot_dimension_numbers<[1], [0], [0], [1], [0, 0, 1, 1], [], []>} : vector<8x32xf32>, vector<32x32xf32>, vector<8x32xf32> -> vector<8x32xf32>
    %25 = arith.addf %22, %24 : vector<8x32xf32>
    %26 = math.tanh %25 : vector<8x32xf32>
    %c16_25 = arith.constant 16 : index
    %c0_26 = arith.constant 0 : index
    %27 = vector.load %arg8[%c16_25, %c0_26] : memref<64x32xf32, #tpu.memory_space<vmem>>, vector<8x32xf32>
    tpu.vector_store %arg8[%c16_25, %c0_26], %26 {strides = array<i32>} : memref<64x32xf32, #tpu.memory_space<vmem>>, vector<8x32xf32>,
    %c24 = arith.constant 24 : index
    %c0_27 = arith.constant 0 : index
    %28 = vector.load %arg7[%c24, %c0_27] : memref<64x32xf32, #tpu.memory_space<vmem>>, vector<8x32xf32>
    %c0_28 = arith.constant 0 : index
    %c0_29 = arith.constant 0 : index
    %29 = vector.load %arg2[%c0_28, %c0_29] : memref<32x32xf32, #tpu.memory_space<vmem>>, vector<32x32xf32>
    %cst_30 = arith.constant dense<0.000000e+00> : vector<8x32xf32>
    %30 = tpu.matmul %26, %29, %cst_30 {dimension_numbers = #tpu.dot_dimension_numbers<[1], [0], [0], [1], [0, 0, 1, 1], [], []>} : vector<8x32xf32>, vector<32x32xf32>, vector<8x32xf32> -> vector<8x32xf32>
    %31 = arith.addf %28, %30 : vector<8x32xf32>
    %32 = math.tanh %31 : vector<8x32xf32>
    %c24_31 = arith.constant 24 : index
    %c0_32 = arith.constant 0 : index
    %33 = vector.load %arg8[%c24_31, %c0_32] : memref<64x32xf32, #tpu.memory_space<vmem>>, vector<8x32xf32>
    tpu.vector_store %arg8[%c24_31, %c0_32], %32 {strides = array<i32>} : memref<64x32xf32, #tpu.memory_space<vmem>>, vector<8x32xf32>,
    %c32 = arith.constant 32 : index
    %c0_33 = arith.constant 0 : index
    %34 = vector.load %arg7[%c32, %c0_33] : memref<64x32xf32, #tpu.memory_space<vmem>>, vector<8x32xf32>
    %c0_34 = arith.constant 0 : index
    %c0_35 = arith.constant 0 : index
    %35 = vector.load %arg2[%c0_34, %c0_35] : memref<32x32xf32, #tpu.memory_space<vmem>>, vector<32x32xf32>
    %cst_36 = arith.constant dense<0.000000e+00> : vector<8x32xf32>
    %36 = tpu.matmul %32, %35, %cst_36 {dimension_numbers = #tpu.dot_dimension_numbers<[1], [0], [0], [1], [0, 0, 1, 1], [], []>} : vector<8x32xf32>, vector<32x32xf32>, vector<8x32xf32> -> vector<8x32xf32>
    %37 = arith.addf %34, %36 : vector<8x32xf32>
    %38 = math.tanh %37 : vector<8x32xf32>
    %c32_37 = arith.constant 32 : index
    %c0_38 = arith.constant 0 : index
    %39 = vector.load %arg8[%c32_37, %c0_38] : memref<64x32xf32, #tpu.memory_space<vmem>>, vector<8x32xf32>
    tpu.vector_store %arg8[%c32_37, %c0_38], %38 {strides = array<i32>} : memref<64x32xf32, #tpu.memory_space<vmem>>, vector<8x32xf32>,
    %c40 = arith.constant 40 : index
    %c0_39 = arith.constant 0 : index
    %40 = vector.load %arg7[%c40, %c0_39] : memref<64x32xf32, #tpu.memory_space<vmem>>, vector<8x32xf32>
    %c0_40 = arith.constant 0 : index
    %c0_41 = arith.constant 0 : index
    %41 = vector.load %arg2[%c0_40, %c0_41] : memref<32x32xf32, #tpu.memory_space<vmem>>, vector<32x32xf32>
    %cst_42 = arith.constant dense<0.000000e+00> : vector<8x32xf32>
    %42 = tpu.matmul %38, %41, %cst_42 {dimension_numbers = #tpu.dot_dimension_numbers<[1], [0], [0], [1], [0, 0, 1, 1], [], []>} : vector<8x32xf32>, vector<32x32xf32>, vector<8x32xf32> -> vector<8x32xf32>
    %43 = arith.addf %40, %42 : vector<8x32xf32>
    %44 = math.tanh %43 : vector<8x32xf32>
    %c40_43 = arith.constant 40 : index
    %c0_44 = arith.constant 0 : index
    %45 = vector.load %arg8[%c40_43, %c0_44] : memref<64x32xf32, #tpu.memory_space<vmem>>, vector<8x32xf32>
    tpu.vector_store %arg8[%c40_43, %c0_44], %44 {strides = array<i32>} : memref<64x32xf32, #tpu.memory_space<vmem>>, vector<8x32xf32>,
    %c48 = arith.constant 48 : index
    %c0_45 = arith.constant 0 : index
    %46 = vector.load %arg7[%c48, %c0_45] : memref<64x32xf32, #tpu.memory_space<vmem>>, vector<8x32xf32>
    %c0_46 = arith.constant 0 : index
    %c0_47 = arith.constant 0 : index
    %47 = vector.load %arg2[%c0_46, %c0_47] : memref<32x32xf32, #tpu.memory_space<vmem>>, vector<32x32xf32>
    %cst_48 = arith.constant dense<0.000000e+00> : vector<8x32xf32>
    %48 = tpu.matmul %44, %47, %cst_48 {dimension_numbers = #tpu.dot_dimension_numbers<[1], [0], [0], [1], [0, 0, 1, 1], [], []>} : vector<8x32xf32>, vector<32x32xf32>, vector<8x32xf32> -> vector<8x32xf32>
    %49 = arith.addf %46, %48 : vector<8x32xf32>
    %50 = math.tanh %49 : vector<8x32xf32>
    %c48_49 = arith.constant 48 : index
    %c0_50 = arith.constant 0 : index
    %51 = vector.load %arg8[%c48_49, %c0_50] : memref<64x32xf32, #tpu.memory_space<vmem>>, vector<8x32xf32>
    tpu.vector_store %arg8[%c48_49, %c0_50], %50 {strides = array<i32>} : memref<64x32xf32, #tpu.memory_space<vmem>>, vector<8x32xf32>,
    %c56 = arith.constant 56 : index
    %c0_51 = arith.constant 0 : index
    %52 = vector.load %arg7[%c56, %c0_51] : memref<64x32xf32, #tpu.memory_space<vmem>>, vector<8x32xf32>
    %c0_52 = arith.constant 0 : index
    %c0_53 = arith.constant 0 : index
    %53 = vector.load %arg2[%c0_52, %c0_53] : memref<32x32xf32, #tpu.memory_space<vmem>>, vector<32x32xf32>
    %cst_54 = arith.constant dense<0.000000e+00> : vector<8x32xf32>
    %54 = tpu.matmul %50, %53, %cst_54 {dimension_numbers = #tpu.dot_dimension_numbers<[1], [0], [0], [1], [0, 0, 1, 1], [], []>} : vector<8x32xf32>, vector<32x32xf32>, vector<8x32xf32> -> vector<8x32xf32>
    %55 = arith.addf %52, %54 : vector<8x32xf32>
    %56 = math.tanh %55 : vector<8x32xf32>
    %c56_55 = arith.constant 56 : index
    %c0_56 = arith.constant 0 : index
    %57 = vector.load %arg8[%c56_55, %c0_56] : memref<64x32xf32, #tpu.memory_space<vmem>>, vector<8x32xf32>
    tpu.vector_store %arg8[%c56_55, %c0_56], %56 {strides = array<i32>} : memref<64x32xf32, #tpu.memory_space<vmem>>, vector<8x32xf32>,
    %c0_57 = arith.constant 0 : index
    %c0_58 = arith.constant 0 : index
    %58 = vector.load %arg6[%c0_57, %c0_58] : memref<8x32xf32, #tpu.memory_space<vmem>>, vector<8x32xf32>
    tpu.vector_store %arg6[%c0_57, %c0_58], %56 {strides = array<i32>} : memref<8x32xf32, #tpu.memory_space<vmem>>, vector<8x32xf32>,
    %c0_59 = arith.constant 0 : index
    %c0_60 = arith.constant 0 : index
    %59 = vector.load %arg8[%c0_59, %c0_60] : memref<64x32xf32, #tpu.memory_space<vmem>>, vector<64x32xf32>
    %c0_61 = arith.constant 0 : index
    %c0_62 = arith.constant 0 : index
    %60 = vector.load %arg3[%c0_61, %c0_62] : memref<32x128xf32, #tpu.memory_space<vmem>>, vector<32x128xf32>
    %cst_63 = arith.constant dense<0.000000e+00> : vector<64x128xf32>
    %61 = tpu.matmul %59, %60, %cst_63 {dimension_numbers = #tpu.dot_dimension_numbers<[1], [0], [0], [1], [0, 0, 1, 1], [], []>} : vector<64x32xf32>, vector<32x128xf32>, vector<64x128xf32> -> vector<64x128xf32>
    %62 = vector.broadcast %2 : vector<1x128xf32> to vector<64x128xf32>
    %63 = arith.addf %61, %62 : vector<64x128xf32>
    %c0_64 = arith.constant 0 : index
    %c0_65 = arith.constant 0 : index
    %64 = vector.load %arg5[%c0_64, %c0_65] : memref<64x128xf32, #tpu.memory_space<vmem>>, vector<64x128xf32>
    tpu.vector_store %arg5[%c0_64, %c0_65], %63 {strides = array<i32>} : memref<64x128xf32, #tpu.memory_space<vmem>>, vector<64x128xf32>,
    return
  }
}

</mosaic_0001>

<llo_original>
// kernel: tpu_custom_call.1
$region0: #{tpu_custom_call.1}
  #allocation0 [shape = 'u32[]', space=smem, size = 0x4, offset = 0x4, fixed_abs, tag = 'smem constant byte address 0x4 - core index']
  #allocation1 [shape = 'u32[144,128]{1,0:T(1,128)}', space=vmem, size = 0x12000, scoped, tag = 'internal scratch']
  #allocation2 [shape = 'f32[64,32]{1,0:T(8,128)}', space=vmem, size = 0x8000, scoped, tag = 'scratch operand']
  #allocation3 [shape = 'f32[64,32]{1,0:T(8,128)}', space=vmem, size = 0x8000, scoped, tag = 'scratch operand']
  %s0 = inlined_call_operand.vmem [shape: f32[64,16], index: 0, kind: input, shape index: {}]
  %s1 = inlined_call_operand.vmem [shape: f32[16,32], index: 1, kind: input, shape index: {}]
  %s2 = inlined_call_operand.vmem [shape: f32[32,32], index: 2, kind: input, shape index: {}]
  %s3 = inlined_call_operand.vmem [shape: f32[32,128], index: 3, kind: input, shape index: {}]
  %s4 = inlined_call_operand.vmem [shape: f32[2,128], index: 4, kind: input, shape index: {}]
  %s5 = inlined_call_operand.hbm [shape: f32[64,128], index: 5, kind: output, shape index: {0}]
  %s6 = inlined_call_operand.hbm [shape: f32[8,32], index: 6, kind: output, shape index: {1}]
  %7 = xla_tuple %s5, %s6
  %s8 = sld [smem:[#allocation0]]
  $region38: #{tpu_custom_call.1} parent=0
    _
  %s10 = ssub.s32 1, %s8
  %s11 = scalar_select 0, %s10, %s8
  $region1: #{tpu_custom_call.1} parent=0
    #allocation4 [shape = 'u8[32768]{0}', space=vmem, size = 0x8000, scoped, tag = 'output window, operand 0, single buffered']
    #allocation5 [shape = 's32[1]{0}', space=sflag, size = 0x4, scoped, tag = 'scoped memory for tpu_custom_call.1']
    #allocation6 [shape = 'u8[4096]{0}', space=vmem, size = 0x1000, scoped, tag = 'output window, operand 1, single buffered']
    #allocation7 [shape = 's32[1]{0}', space=sflag, size = 0x4, scoped, tag = 'scoped memory for tpu_custom_call.1']
    %12 = vsyncpa [#allocation5], 0
    %13 = vsyncpa [#allocation7], 0
    // Predicated region
    $region2: #{tpu_custom_call.1} parent=1 // pred_check
      _
    $region3: #{tpu_custom_call.1} parent=1 // pred_check_branch
      %15 = sbr.rel (0) target = $region5
    $region4: #{tpu_custom_call.1} parent=1 // pred_region
      _
    $region5: #{tpu_custom_call.1} parent=1 // pred_fallthru
      _
    // Predicated region
    $region6: #{tpu_custom_call.1} parent=1 // pred_check
      _
    $region7: #{tpu_custom_call.1} parent=1 // pred_check_branch
      %17 = sbr.rel (0) target = $region9
    $region8: #{tpu_custom_call.1} parent=1 // pred_region
      _
    $region9: #{tpu_custom_call.1} parent=1 // pred_fallthru
      _
    // Predicated region
    $region10: #{tpu_custom_call.1} parent=1 // pred_check
      _
    $region11: #{tpu_custom_call.1} parent=1 // pred_check_branch
      %19 = sbr.rel (0) target = $region13
    $region12: #{tpu_custom_call.1} parent=1 // pred_region
      _
    $region13: #{tpu_custom_call.1} parent=1 // pred_fallthru
      _
    // Predicated region
    $region14: #{tpu_custom_call.1} parent=1 // pred_check
      _
    $region15: #{tpu_custom_call.1} parent=1 // pred_check_branch
      %21 = sbr.rel (0) target = $region17
    $region16: #{tpu_custom_call.1} parent=1 // pred_region
      _
    $region17: #{tpu_custom_call.1} parent=1 // pred_fallthru
      _
    // Predicated region
    $region18: #{tpu_custom_call.1} parent=1 // pred_check
      _
    $region19: #{tpu_custom_call.1} parent=1 // pred_check_branch
      %23 = sbr.rel (0) target = $region21
    $region20: #{tpu_custom_call.1} parent=1 // pred_region
      _
    $region21: #{tpu_custom_call.1} parent=1 // pred_fallthru
      _
    %v24 = vld [vmem:[%s4] sm:$0x3]
    %v25 = vld [vmem:[%s0] sm:$0xff]
    %v26 = vld [vmem:[%s0 + $0x8] sm:$0xff]
    %v27 = vld [vmem:[%s0 + $0x10] sm:$0xff]
    %v28 = vld [vmem:[%s0 + $0x18] sm:$0xff]
    %v29 = vld [vmem:[%s0 + $0x20] sm:$0xff]
    %v30 = vld [vmem:[%s0 + $0x28] sm:$0xff]
    %v31 = vld [vmem:[%s0 + $0x30] sm:$0xff]
    %v32 = vld [vmem:[%s0 + $0x38] sm:$0xff]
    %v33 = vld [vmem:[%s1] sm:$0xff]
    %v34 = vld [vmem:[%s1 + $0x8] sm:$0xff]
    %v35 = vlaneseq
    %v36 = vshrl.u32 %v35, 7
    %v37 = vsub.s32 0, %v36
    %v38 = vrot.slane %v24, %v37
    %vm39 = vcmask 130048
    %v41 = vsel %vm39, %v25, 0
    %v44 = vsel %vm39, %v26, 0
    %v47 = vsel %vm39, %v27, 0
    %v50 = vsel %vm39, %v28, 0
    %v53 = vsel %vm39, %v29, 0
    %v56 = vsel %vm39, %v30, 0
    %v59 = vsel %vm39, %v31, 0
    %v62 = vsel %vm39, %v32, 0
    %64 = vmatprep.subr.mxu0 0.0
    %65 = vmatpush1.msra.mxu0 %v33
    %66 = vmatprep.subr.mxu0 0.0
    %67 = vmatpush1.msra.mxu0 %v34
    %68 = vmatprep.subr.mxu0 0.0
    %69 = vmatpush1.msra.mxu0 0.0
    %70 = vmatprep.subr.mxu0 0.0
    %71 = vmatpush1.msra.mxu0 0.0
    %72 = vmatprep.subr.mxu0 0.0
    %73 = vmatpush1.msra.mxu0 0.0
    %74 = vmatprep.subr.mxu0 0.0
    %75 = vmatpush1.msra.mxu0 0.0
    %76 = vmatprep.subr.mxu0 0.0
    %77 = vmatpush1.msra.mxu0 0.0
    %78 = vmatprep.subr.mxu0 0.0
    %79 = vmatpush1.msra.mxu0 0.0
    %80 = vmatprep.subr.mxu0 0.0
    %81 = vmatpush1.msra.mxu0 0.0
    %82 = vmatprep.subr.mxu0 0.0
    %83 = vmatpush1.msra.mxu0 0.0
    %84 = vmatprep.subr.mxu0 0.0
    %85 = vmatpush1.msra.mxu0 0.0
    %86 = vmatprep.subr.mxu0 0.0
    %87 = vmatpush1.msra.mxu0 0.0
    %88 = vmatprep.subr.mxu0 0.0
    %89 = vmatpush1.msra.mxu0 0.0
    %90 = vmatprep.subr.mxu0 0.0
    %91 = vmatpush1.msra.mxu0 0.0
    %92 = vmatprep.subr.mxu0 0.0
    %93 = vmatpush1.msra.mxu0 0.0
    %94 = vmatprep.subr.mxu0 0.0
    %95 = vmatpush1.msra.mxu0 0.0
    %96 = vmatprep.subr.mxu0 0.0
    %97 = vmatpush1.msra.mxu0 0.0
    %98 = vmatprep.subr.mxu0 0.0
    %99 = vmatpush1.msra.mxu0 0.0
    %100 = vmatprep.subr.mxu0 0.0
    %101 = vmatpush1.msra.mxu0 0.0
    %102 = vmatprep.subr.mxu0 0.0
    %103 = vmatpush1.msra.mxu0 0.0
    %104 = vmatprep.subr.mxu0 0.0
    %105 = vmatpush1.msra.mxu0 0.0
    %106 = vmatprep.subr.mxu0 0.0
    %107 = vmatpush1.msra.mxu0 0.0
    %108 = vmatprep.subr.mxu0 0.0
    %109 = vmatpush1.msra.mxu0 0.0
    %110 = vmatprep.subr.mxu0 0.0
    %111 = vmatpush1.msra.mxu0 0.0
    %112 = vmatprep.subr.mxu0 0.0
    %113 = vmatpush1.msra.mxu0 0.0
    %114 = vmatprep.subr.mxu0 0.0
    %115 = vmatpush1.msra.mxu0 0.0
    %116 = vmatprep.subr.mxu0 0.0
    %117 = vmatpush1.msra.mxu0 0.0
    %118 = vmatprep.subr.mxu0 0.0
    %119 = vmatpush1.msra.mxu0 0.0
    %120 = vmatprep.subr.mxu0 0.0
    %121 = vmatpush1.msra.mxu0 0.0
    %122 = vmatprep.subr.mxu0 0.0
    %123 = vmatpush1.msra.mxu0 0.0
    %124 = vmatprep.subr.mxu0 0.0
    %125 = vmatpush1.msra.mxu0 0.0
    %126 = vmatprep.subr.mxu0 0.0
    %127 = vmatpush1.msra.mxu0 0.0
    %128 = vmatprep.mubr.f32.mxu0 0.0
    %129 = vmatmul.mubr.f32.gmra.mrb[0].mxu0 %v41
    %v130 = vpop.f32.mrb[0].mxu0
    %v131 = vadd.f32 %v38, %v130
    %v132 = vpop.f32.mrb[0].mxu0
    %133 = vmatprep.mubr.f32.mxu0 0.0
    %134 = vmatmul.mubr.f32.gmra.mrb[0].mxu0 %v44
    %v135 = vpop.f32.mrb[0].mxu0
    %v136 = vadd.f32 %v38, %v135
    %v137 = vpop.f32.mrb[0].mxu0
    %138 = vmatprep.mubr.f32.mxu0 0.0
    %139 = vmatmul.mubr.f32.gmra.mrb[0].mxu0 %v47
    %v140 = vpop.f32.mrb[0].mxu0
    %v141 = vadd.f32 %v38, %v140
    %v142 = vpop.f32.mrb[0].mxu0
    %143 = vmatprep.mubr.f32.mxu0 0.0
    %144 = vmatmul.mubr.f32.gmra.mrb[0].mxu0 %v50
    %v145 = vpop.f32.mrb[0].mxu0
    %v146 = vadd.f32 %v38, %v145
    %v147 = vpop.f32.mrb[0].mxu0
    %148 = vmatprep.mubr.f32.mxu0 0.0
    %149 = vmatmul.mubr.f32.gmra.mrb[0].mxu0 %v53
    %v150 = vpop.f32.mrb[0].mxu0
    %v151 = vadd.f32 %v38, %v150
    %v152 = vpop.f32.mrb[0].mxu0
    %153 = vmatprep.mubr.f32.mxu0 0.0
    %154 = vmatmul.mubr.f32.gmra.mrb[0].mxu0 %v56
    %v155 = vpop.f32.mrb[0].mxu0
    %v156 = vadd.f32 %v38, %v155
    %v157 = vpop.f32.mrb[0].mxu0
    %158 = vmatprep.mubr.f32.mxu0 0.0
    %159 = vmatmul.mubr.f32.gmra.mrb[0].mxu0 %v59
    %v160 = vpop.f32.mrb[0].mxu0
    %v161 = vadd.f32 %v38, %v160
    %v162 = vpop.f32.mrb[0].mxu0
    %163 = vmatprep.mubr.f32.mxu0 0.0
    %164 = vmatmul.mubr.f32.gmra.mrb[0].mxu0 %v62
    %v165 = vpop.f32.mrb[0].mxu0
    %v166 = vadd.f32 %v38, %v165
    %v167 = vpop.f32.mrb[0].mxu0
    %168 = vdwg.mxu0
    %vm169 = vcmask 261120
    %170 = vst.msk [vmem:[#allocation2] sm:$0xff] %vm169, %v131
    %171 = vst.msk [vmem:[#allocation2 + $0x8] sm:$0xff] %vm169, %v136
    %172 = vst.msk [vmem:[#allocation2 + $0x10] sm:$0xff] %vm169, %v141
    %173 = vst.msk [vmem:[#allocation2 + $0x18] sm:$0xff] %vm169, %v146
    %174 = vst.msk [vmem:[#allocation2 + $0x20] sm:$0xff] %vm169, %v151
    %175 = vst.msk [vmem:[#allocation2 + $0x28] sm:$0xff] %vm169, %v156
    %176 = vst.msk [vmem:[#allocation2 + $0x30] sm:$0xff] %vm169, %v161
    %177 = vst.msk [vmem:[#allocation2 + $0x38] sm:$0xff] %vm169, %v166
    %v178 = vld [vmem:[#allocation2] sm:$0xff]
    %v179 = vld [vmem:[%s2] sm:$0xff]
    %v180 = vld [vmem:[%s2 + $0x8] sm:$0xff]
    %v181 = vld [vmem:[%s2 + $0x10] sm:$0xff]
    %v182 = vld [vmem:[%s2 + $0x18] sm:$0xff]
    %v184 = vsel %vm169, 0.0, 0
    %186 = vmatprep.subr.mxu0 0.0
    %187 = vmatpush1.msra.mxu0 %v179
    %188 = vmatprep.subr.mxu0 0.0
    %189 = vmatpush1.msra.mxu0 %v180
    %190 = vmatprep.subr.mxu0 0.0
    %191 = vmatpush1.msra.mxu0 %v181
    %192 = vmatprep.subr.mxu0 0.0
    %193 = vmatpush1.msra.mxu0 %v182
    %194 = vmatprep.subr.mxu0 0.0
    %195 = vmatpush1.msra.mxu0 0.0
    %196 = vmatprep.subr.mxu0 0.0
    %197 = vmatpush1.msra.mxu0 0.0
    %198 = vmatprep.subr.mxu0 0.0
    %199 = vmatpush1.msra.mxu0 0.0
    %200 = vmatprep.subr.mxu0 0.0
    %201 = vmatpush1.msra.mxu0 0.0
    %202 = vmatprep.subr.mxu0 0.0
    %203 = vmatpush1.msra.mxu0 0.0
    %204 = vmatprep.subr.mxu0 0.0
    %205 = vmatpush1.msra.mxu0 0.0
    %206 = vmatprep.subr.mxu0 0.0
    %207 = vmatpush1.msra.mxu0 0.0
    %208 = vmatprep.subr.mxu0 0.0
    %209 = vmatpush1.msra.mxu0 0.0
    %210 = vmatprep.subr.mxu0 0.0
    %211 = vmatpush1.msra.mxu0 0.0
    %212 = vmatprep.subr.mxu0 0.0
    %213 = vmatpush1.msra.mxu0 0.0
    %214 = vmatprep.subr.mxu0 0.0
    %215 = vmatpush1.msra.mxu0 0.0
    %216 = vmatprep.subr.mxu0 0.0
    %217 = vmatpush1.msra.mxu0 0.0
    %218 = vmatprep.subr.mxu0 0.0
    %219 = vmatpush1.msra.mxu0 0.0
    %220 = vmatprep.subr.mxu0 0.0
    %221 = vmatpush1.msra.mxu0 0.0
    %222 = vmatprep.subr.mxu0 0.0
    %223 = vmatpush1.msra.mxu0 0.0
    %224 = vmatprep.subr.mxu0 0.0
    %225 = vmatpush1.msra.mxu0 0.0
    %226 = vmatprep.subr.mxu0 0.0
    %227 = vmatpush1.msra.mxu0 0.0
    %228 = vmatprep.subr.mxu0 0.0
    %229 = vmatpush1.msra.mxu0 0.0
    %230 = vmatprep.subr.mxu0 0.0
    %231 = vmatpush1.msra.mxu0 0.0
    %232 = vmatprep.subr.mxu0 0.0
    %233 = vmatpush1.msra.mxu0 0.0
    %234 = vmatprep.subr.mxu0 0.0
    %235 = vmatpush1.msra.mxu0 0.0
    %236 = vmatprep.subr.mxu0 0.0
    %237 = vmatpush1.msra.mxu0 0.0
    %238 = vmatprep.subr.mxu0 0.0
    %239 = vmatpush1.msra.mxu0 0.0
    %240 = vmatprep.subr.mxu0 0.0
    %241 = vmatpush1.msra.mxu0 0.0
    %242 = vmatprep.subr.mxu0 0.0
    %243 = vmatpush1.msra.mxu0 0.0
    %244 = vmatprep.subr.mxu0 0.0
    %245 = vmatpush1.msra.mxu0 0.0
    %246 = vmatprep.subr.mxu0 0.0
    %247 = vmatpush1.msra.mxu0 0.0
    %248 = vmatprep.subr.mxu0 0.0
    %249 = vmatpush1.msra.mxu0 0.0
    %250 = vmatprep.mubr.f32.mxu0 0.0
    %251 = vmatmul.mubr.f32.gmra.mrb[0].mxu0 %v184
    %v252 = vpop.f32.mrb[0].mxu0
    %v253 = vadd.f32 0.0, %v252
    %v254 = vpop.f32.mrb[0].mxu0
    %255 = vdwg.mxu0
    %v256 = vadd.f32 %v178, %v253
    %v257 = vtanh.pop %v256
    %258 = vst.msk [vmem:[#allocation3] sm:$0xff] %vm169, %v257
    %v259 = vld [vmem:[#allocation2 + $0x8] sm:$0xff]
    %v260 = vld [vmem:[%s2] sm:$0xff]
    %v261 = vld [vmem:[%s2 + $0x8] sm:$0xff]
    %v262 = vld [vmem:[%s2 + $0x10] sm:$0xff]
    %v263 = vld [vmem:[%s2 + $0x18] sm:$0xff]
    %v265 = vsel %vm169, %v257, 0
    %267 = vmatprep.subr.mxu0 0.0
    %268 = vmatpush1.msra.mxu0 %v260
    %269 = vmatprep.subr.mxu0 0.0
    %270 = vmatpush1.msra.mxu0 %v261
    %271 = vmatprep.subr.mxu0 0.0
    %272 = vmatpush1.msra.mxu0 %v262
    %273 = vmatprep.subr.mxu0 0.0
    %274 = vmatpush1.msra.mxu0 %v263
    %275 = vmatprep.subr.mxu0 0.0
    %276 = vmatpush1.msra.mxu0 0.0
    %277 = vmatprep.subr.mxu0 0.0
    %278 = vmatpush1.msra.mxu0 0.0
    %279 = vmatprep.subr.mxu0 0.0
    %280 = vmatpush1.msra.mxu0 0.0
    %281 = vmatprep.subr.mxu0 0.0
    %282 = vmatpush1.msra.mxu0 0.0
    %283 = vmatprep.subr.mxu0 0.0
    %284 = vmatpush1.msra.mxu0 0.0
    %285 = vmatprep.subr.mxu0 0.0
    %286 = vmatpush1.msra.mxu0 0.0
    %287 = vmatprep.subr.mxu0 0.0
    %288 = vmatpush1.msra.mxu0 0.0
    %289 = vmatprep.subr.mxu0 0.0
    %290 = vmatpush1.msra.mxu0 0.0
    %291 = vmatprep.subr.mxu0 0.0
    %292 = vmatpush1.msra.mxu0 0.0
    %293 = vmatprep.subr.mxu0 0.0
    %294 = vmatpush1.msra.mxu0 0.0
    %295 = vmatprep.subr.mxu0 0.0
    %296 = vmatpush1.msra.mxu0 0.0
    %297 = vmatprep.subr.mxu0 0.0
    %298 = vmatpush1.msra.mxu0 0.0
    %299 = vmatprep.subr.mxu0 0.0
    %300 = vmatpush1.msra.mxu0 0.0
    %301 = vmatprep.subr.mxu0 0.0
    %302 = vmatpush1.msra.mxu0 0.0
    %303 = vmatprep.subr.mxu0 0.0
    %304 = vmatpush1.msra.mxu0 0.0
    %305 = vmatprep.subr.mxu0 0.0
    %306 = vmatpush1.msra.mxu0 0.0
    %307 = vmatprep.subr.mxu0 0.0
    %308 = vmatpush1.msra.mxu0 0.0
    %309 = vmatprep.subr.mxu0 0.0
    %310 = vmatpush1.msra.mxu0 0.0
    %311 = vmatprep.subr.mxu0 0.0
    %312 = vmatpush1.msra.mxu0 0.0
    %313 = vmatprep.subr.mxu0 0.0
    %314 = vmatpush1.msra.mxu0 0.0
    %315 = vmatprep.subr.mxu0 0.0
    %316 = vmatpush1.msra.mxu0 0.0
    %317 = vmatprep.subr.mxu0 0.0
    %318 = vmatpush1.msra.mxu0 0.0
    %319 = vmatprep.subr.mxu0 0.0
    %320 = vmatpush1.msra.mxu0 0.0
    %321 = vmatprep.subr.mxu0 0.0
    %322 = vmatpush1.msra.mxu0 0.0
    %323 = vmatprep.subr.mxu0 0.0
    %324 = vmatpush1.msra.mxu0 0.0
    %325 = vmatprep.subr.mxu0 0.0
    %326 = vmatpush1.msra.mxu0 0.0
    %327 = vmatprep.subr.mxu0 0.0
    %328 = vmatpush1.msra.mxu0 0.0
    %329 = vmatprep.subr.mxu0 0.0
    %330 = vmatpush1.msra.mxu0 0.0
    %331 = vmatprep.mubr.f32.mxu0 0.0
    %332 = vmatmul.mubr.f32.gmra.mrb[0].mxu0 %v265
    %v333 = vpop.f32.mrb[0].mxu0
    %v334 = vadd.f32 0.0, %v333
    %v335 = vpop.f32.mrb[0].mxu0
    %336 = vdwg.mxu0
    %v337 = vadd.f32 %v259, %v334
    %v338 = vtanh.pop %v337
    %339 = vst.msk [vmem:[#allocation3 + $0x8] sm:$0xff] %vm169, %v338
    %v340 = vld [vmem:[#allocation2 + $0x10] sm:$0xff]
    %v341 = vld [vmem:[%s2] sm:$0xff]
    %v342 = vld [vmem:[%s2 + $0x8] sm:$0xff]
    %v343 = vld [vmem:[%s2 + $0x10] sm:$0xff]
    %v344 = vld [vmem:[%s2 + $0x18] sm:$0xff]
    %v346 = vsel %vm169, %v338, 0
    %348 = vmatprep.subr.mxu0 0.0
    %349 = vmatpush1.msra.mxu0 %v341
    %350 = vmatprep.subr.mxu0 0.0
    %351 = vmatpush1.msra.mxu0 %v342
    %352 = vmatprep.subr.mxu0 0.0
    %353 = vmatpush1.msra.mxu0 %v343
    %354 = vmatprep.subr.mxu0 0.0
    %355 = vmatpush1.msra.mxu0 %v344
    %356 = vmatprep.subr.mxu0 0.0
    %357 = vmatpush1.msra.mxu0 0.0
    %358 = vmatprep.subr.mxu0 0.0
    %359 = vmatpush1.msra.mxu0 0.0
    %360 = vmatprep.subr.mxu0 0.0
    %361 = vmatpush1.msra.mxu0 0.0
    %362 = vmatprep.subr.mxu0 0.0
    %363 = vmatpush1.msra.mxu0 0.0
    %364 = vmatprep.subr.mxu0 0.0
    %365 = vmatpush1.msra.mxu0 0.0
    %366 = vmatprep.subr.mxu0 0.0
    %367 = vmatpush1.msra.mxu0 0.0
    %368 = vmatprep.subr.mxu0 0.0
    %369 = vmatpush1.msra.mxu0 0.0
    %370 = vmatprep.subr.mxu0 0.0
    %371 = vmatpush1.msra.mxu0 0.0
    %372 = vmatprep.subr.mxu0 0.0
    %373 = vmatpush1.msra.mxu0 0.0
    %374 = vmatprep.subr.mxu0 0.0
    %375 = vmatpush1.msra.mxu0 0.0
    %376 = vmatprep.subr.mxu0 0.0
    %377 = vmatpush1.msra.mxu0 0.0
    %378 = vmatprep.subr.mxu0 0.0
    %379 = vmatpush1.msra.mxu0 0.0
    %380 = vmatprep.subr.mxu0 0.0
    %381 = vmatpush1.msra.mxu0 0.0
    %382 = vmatprep.subr.mxu0 0.0
    %383 = vmatpush1.msra.mxu0 0.0
    %384 = vmatprep.subr.mxu0 0.0
    %385 = vmatpush1.msra.mxu0 0.0
    %386 = vmatprep.subr.mxu0 0.0
    %387 = vmatpush1.msra.mxu0 0.0
    %388 = vmatprep.subr.mxu0 0.0
    %389 = vmatpush1.msra.mxu0 0.0
    %390 = vmatprep.subr.mxu0 0.0
    %391 = vmatpush1.msra.mxu0 0.0
    %392 = vmatprep.subr.mxu0 0.0
    %393 = vmatpush1.msra.mxu0 0.0
    %394 = vmatprep.subr.mxu0 0.0
    %395 = vmatpush1.msra.mxu0 0.0
    %396 = vmatprep.subr.mxu0 0.0
    %397 = vmatpush1.msra.mxu0 0.0
    %398 = vmatprep.subr.mxu0 0.0
    %399 = vmatpush1.msra.mxu0 0.0
    %400 = vmatprep.subr.mxu0 0.0
    %401 = vmatpush1.msra.mxu0 0.0
    %402 = vmatprep.subr.mxu0 0.0
    %403 = vmatpush1.msra.mxu0 0.0
    %404 = vmatprep.subr.mxu0 0.0
    %405 = vmatpush1.msra.mxu0 0.0
    %406 = vmatprep.subr.mxu0 0.0
    %407 = vmatpush1.msra.mxu0 0.0
    %408 = vmatprep.subr.mxu0 0.0
    %409 = vmatpush1.msra.mxu0 0.0
    %410 = vmatprep.subr.mxu0 0.0
    %411 = vmatpush1.msra.mxu0 0.0
    %412 = vmatprep.mubr.f32.mxu0 0.0
    %413 = vmatmul.mubr.f32.gmra.mrb[0].mxu0 %v346
    %v414 = vpop.f32.mrb[0].mxu0
    %v415 = vadd.f32 0.0, %v414
    %v416 = vpop.f32.mrb[0].mxu0
    %417 = vdwg.mxu0
    %v418 = vadd.f32 %v340, %v415
    %v419 = vtanh.pop %v418
    %420 = vst.msk [vmem:[#allocation3 + $0x10] sm:$0xff] %vm169, %v419
    %v421 = vld [vmem:[#allocation2 + $0x18] sm:$0xff]
    %v422 = vld [vmem:[%s2] sm:$0xff]
    %v423 = vld [vmem:[%s2 + $0x8] sm:$0xff]
    %v424 = vld [vmem:[%s2 + $0x10] sm:$0xff]
    %v425 = vld [vmem:[%s2 + $0x18] sm:$0xff]
    %v427 = vsel %vm169, %v419, 0
    %429 = vmatprep.subr.mxu0 0.0
    %430 = vmatpush1.msra.mxu0 %v422
    %431 = vmatprep.subr.mxu0 0.0
    %432 = vmatpush1.msra.mxu0 %v423
    %433 = vmatprep.subr.mxu0 0.0
    %434 = vmatpush1.msra.mxu0 %v424
    %435 = vmatprep.subr.mxu0 0.0
    %436 = vmatpush1.msra.mxu0 %v425
    %437 = vmatprep.subr.mxu0 0.0
    %438 = vmatpush1.msra.mxu0 0.0
    %439 = vmatprep.subr.mxu0 0.0
    %440 = vmatpush1.msra.mxu0 0.0
    %441 = vmatprep.subr.mxu0 0.0
    %442 = vmatpush1.msra.mxu0 0.0
    %443 = vmatprep.subr.mxu0 0.0
    %444 = vmatpush1.msra.mxu0 0.0
    %445 = vmatprep.subr.mxu0 0.0
    %446 = vmatpush1.msra.mxu0 0.0
    %447 = vmatprep.subr.mxu0 0.0
    %448 = vmatpush1.msra.mxu0 0.0
    %449 = vmatprep.subr.mxu0 0.0
    %450 = vmatpush1.msra.mxu0 0.0
    %451 = vmatprep.subr.mxu0 0.0
    %452 = vmatpush1.msra.mxu0 0.0
    %453 = vmatprep.subr.mxu0 0.0
    %454 = vmatpush1.msra.mxu0 0.0
    %455 = vmatprep.subr.mxu0 0.0
    %456 = vmatpush1.msra.mxu0 0.0
    %457 = vmatprep.subr.mxu0 0.0
    %458 = vmatpush1.msra.mxu0 0.0
    %459 = vmatprep.subr.mxu0 0.0
    %460 = vmatpush1.msra.mxu0 0.0
    %461 = vmatprep.subr.mxu0 0.0
    %462 = vmatpush1.msra.mxu0 0.0
    %463 = vmatprep.subr.mxu0 0.0
    %464 = vmatpush1.msra.mxu0 0.0
    %465 = vmatprep.subr.mxu0 0.0
    %466 = vmatpush1.msra.mxu0 0.0
    %467 = vmatprep.subr.mxu0 0.0
    %468 = vmatpush1.msra.mxu0 0.0
    %469 = vmatprep.subr.mxu0 0.0
    %470 = vmatpush1.msra.mxu0 0.0
    %471 = vmatprep.subr.mxu0 0.0
    %472 = vmatpush1.msra.mxu0 0.0
    %473 = vmatprep.subr.mxu0 0.0
    %474 = vmatpush1.msra.mxu0 0.0
    %475 = vmatprep.subr.mxu0 0.0
    %476 = vmatpush1.msra.mxu0 0.0
    %477 = vmatprep.subr.mxu0 0.0
    %478 = vmatpush1.msra.mxu0 0.0
    %479 = vmatprep.subr.mxu0 0.0
    %480 = vmatpush1.msra.mxu0 0.0
    %481 = vmatprep.subr.mxu0 0.0
    %482 = vmatpush1.msra.mxu0 0.0
    %483 = vmatprep.subr.mxu0 0.0
    %484 = vmatpush1.msra.mxu0 0.0
    %485 = vmatprep.subr.mxu0 0.0
    %486 = vmatpush1.msra.mxu0 0.0
    %487 = vmatprep.subr.mxu0 0.0
    %488 = vmatpush1.msra.mxu0 0.0
    %489 = vmatprep.subr.mxu0 0.0
    %490 = vmatpush1.msra.mxu0 0.0
    %491 = vmatprep.subr.mxu0 0.0
    %492 = vmatpush1.msra.mxu0 0.0
    %493 = vmatprep.mubr.f32.mxu0 0.0
    %494 = vmatmul.mubr.f32.gmra.mrb[0].mxu0 %v427
    %v495 = vpop.f32.mrb[0].mxu0
    %v496 = vadd.f32 0.0, %v495
    %v497 = vpop.f32.mrb[0].mxu0
    %498 = vdwg.mxu0
    %v499 = vadd.f32 %v421, %v496
    %v500 = vtanh.pop %v499
    %501 = vst.msk [vmem:[#allocation3 + $0x18] sm:$0xff] %vm169, %v500
    %v502 = vld [vmem:[#allocation2 + $0x20] sm:$0xff]
    %v503 = vld [vmem:[%s2] sm:$0xff]
    %v504 = vld [vmem:[%s2 + $0x8] sm:$0xff]
    %v505 = vld [vmem:[%s2 + $0x10] sm:$0xff]
    %v506 = vld [vmem:[%s2 + $0x18] sm:$0xff]
    %v508 = vsel %vm169, %v500, 0
    %510 = vmatprep.subr.mxu0 0.0
    %511 = vmatpush1.msra.mxu0 %v503
    %512 = vmatprep.subr.mxu0 0.0
    %513 = vmatpush1.msra.mxu0 %v504
    %514 = vmatprep.subr.mxu0 0.0
    %515 = vmatpush1.msra.mxu0 %v505
    %516 = vmatprep.subr.mxu0 0.0
    %517 = vmatpush1.msra.mxu0 %v506
    %518 = vmatprep.subr.mxu0 0.0
    %519 = vmatpush1.msra.mxu0 0.0
    %520 = vmatprep.subr.mxu0 0.0
    %521 = vmatpush1.msra.mxu0 0.0
    %522 = vmatprep.subr.mxu0 0.0
    %523 = vmatpush1.msra.mxu0 0.0
    %524 = vmatprep.subr.mxu0 0.0
    %525 = vmatpush1.msra.mxu0 0.0
    %526 = vmatprep.subr.mxu0 0.0
    %527 = vmatpush1.msra.mxu0 0.0
    %528 = vmatprep.subr.mxu0 0.0
    %529 = vmatpush1.msra.mxu0 0.0
    %530 = vmatprep.subr.mxu0 0.0
    %531 = vmatpush1.msra.mxu0 0.0
    %532 = vmatprep.subr.mxu0 0.0
    %533 = vmatpush1.msra.mxu0 0.0
    %534 = vmatprep.subr.mxu0 0.0
    %535 = vmatpush1.msra.mxu0 0.0
    %536 = vmatprep.subr.mxu0 0.0
    %537 = vmatpush1.msra.mxu0 0.0
    %538 = vmatprep.subr.mxu0 0.0
    %539 = vmatpush1.msra.mxu0 0.0
    %540 = vmatprep.subr.mxu0 0.0
    %541 = vmatpush1.msra.mxu0 0.0
    %542 = vmatprep.subr.mxu0 0.0
    %543 = vmatpush1.msra.mxu0 0.0
    %544 = vmatprep.subr.mxu0 0.0
    %545 = vmatpush1.msra.mxu0 0.0
    %546 = vmatprep.subr.mxu0 0.0
    %547 = vmatpush1.msra.mxu0 0.0
    %548 = vmatprep.subr.mxu0 0.0
    %549 = vmatpush1.msra.mxu0 0.0
    %550 = vmatprep.subr.mxu0 0.0
    %551 = vmatpush1.msra.mxu0 0.0
    %552 = vmatprep.subr.mxu0 0.0
    %553 = vmatpush1.msra.mxu0 0.0
    %554 = vmatprep.subr.mxu0 0.0
    %555 = vmatpush1.msra.mxu0 0.0
    %556 = vmatprep.subr.mxu0 0.0
    %557 = vmatpush1.msra.mxu0 0.0
    %558 = vmatprep.subr.mxu0 0.0
    %559 = vmatpush1.msra.mxu0 0.0
    %560 = vmatprep.subr.mxu0 0.0
    %561 = vmatpush1.msra.mxu0 0.0
    %562 = vmatprep.subr.mxu0 0.0
    %563 = vmatpush1.msra.mxu0 0.0
    %564 = vmatprep.subr.mxu0 0.0
    %565 = vmatpush1.msra.mxu0 0.0
    %566 = vmatprep.subr.mxu0 0.0
    %567 = vmatpush1.msra.mxu0 0.0
    %568 = vmatprep.subr.mxu0 0.0
    %569 = vmatpush1.msra.mxu0 0.0
    %570 = vmatprep.subr.mxu0 0.0
    %571 = vmatpush1.msra.mxu0 0.0
    %572 = vmatprep.subr.mxu0 0.0
    %573 = vmatpush1.msra.mxu0 0.0
    %574 = vmatprep.mubr.f32.mxu0 0.0
    %575 = vmatmul.mubr.f32.gmra.mrb[0].mxu0 %v508
    %v576 = vpop.f32.mrb[0].mxu0
    %v577 = vadd.f32 0.0, %v576
    %v578 = vpop.f32.mrb[0].mxu0
    %579 = vdwg.mxu0
    %v580 = vadd.f32 %v502, %v577
    %v581 = vtanh.pop %v580
    %582 = vst.msk [vmem:[#allocation3 + $0x20] sm:$0xff] %vm169, %v581
    %v583 = vld [vmem:[#allocation2 + $0x28] sm:$0xff]
    %v584 = vld [vmem:[%s2] sm:$0xff]
    %v585 = vld [vmem:[%s2 + $0x8] sm:$0xff]
    %v586 = vld [vmem:[%s2 + $0x10] sm:$0xff]
    %v587 = vld [vmem:[%s2 + $0x18] sm:$0xff]
    %v589 = vsel %vm169, %v581, 0
    %591 = vmatprep.subr.mxu0 0.0
    %592 = vmatpush1.msra.mxu0 %v584
    %593 = vmatprep.subr.mxu0 0.0
    %594 = vmatpush1.msra.mxu0 %v585
    %595 = vmatprep.subr.mxu0 0.0
    %596 = vmatpush1.msra.mxu0 %v586
    %597 = vmatprep.subr.mxu0 0.0
    %598 = vmatpush1.msra.mxu0 %v587
    %599 = vmatprep.subr.mxu0 0.0
    %600 = vmatpush1.msra.mxu0 0.0
    %601 = vmatprep.subr.mxu0 0.0
    %602 = vmatpush1.msra.mxu0 0.0
    %603 = vmatprep.subr.mxu0 0.0
    %604 = vmatpush1.msra.mxu0 0.0
    %605 = vmatprep.subr.mxu0 0.0
    %606 = vmatpush1.msra.mxu0 0.0
    %607 = vmatprep.subr.mxu0 0.0
    %608 = vmatpush1.msra.mxu0 0.0
    %609 = vmatprep.subr.mxu0 0.0
    %610 = vmatpush1.msra.mxu0 0.0
    %611 = vmatprep.subr.mxu0 0.0
    %612 = vmatpush1.msra.mxu0 0.0
    %613 = vmatprep.subr.mxu0 0.0
    %614 = vmatpush1.msra.mxu0 0.0
    %615 = vmatprep.subr.mxu0 0.0
    %616 = vmatpush1.msra.mxu0 0.0
    %617 = vmatprep.subr.mxu0 0.0
    %618 = vmatpush1.msra.mxu0 0.0
    %619 = vmatprep.subr.mxu0 0.0
    %620 = vmatpush1.msra.mxu0 0.0
    %621 = vmatprep.subr.mxu0 0.0
    %622 = vmatpush1.msra.mxu0 0.0
    %623 = vmatprep.subr.mxu0 0.0
    %624 = vmatpush1.msra.mxu0 0.0
    %625 = vmatprep.subr.mxu0 0.0
    %626 = vmatpush1.msra.mxu0 0.0
    %627 = vmatprep.subr.mxu0 0.0
    %628 = vmatpush1.msra.mxu0 0.0
    %629 = vmatprep.subr.mxu0 0.0
    %630 = vmatpush1.msra.mxu0 0.0
    %631 = vmatprep.subr.mxu0 0.0
    %632 = vmatpush1.msra.mxu0 0.0
    %633 = vmatprep.subr.mxu0 0.0
    %634 = vmatpush1.msra.mxu0 0.0
    %635 = vmatprep.subr.mxu0 0.0
    %636 = vmatpush1.msra.mxu0 0.0
    %637 = vmatprep.subr.mxu0 0.0
    %638 = vmatpush1.msra.mxu0 0.0
    %639 = vmatprep.subr.mxu0 0.0
    %640 = vmatpush1.msra.mxu0 0.0
    %641 = vmatprep.subr.mxu0 0.0
    %642 = vmatpush1.msra.mxu0 0.0
    %643 = vmatprep.subr.mxu0 0.0
    %644 = vmatpush1.msra.mxu0 0.0
    %645 = vmatprep.subr.mxu0 0.0
    %646 = vmatpush1.msra.mxu0 0.0
    %647 = vmatprep.subr.mxu0 0.0
    %648 = vmatpush1.msra.mxu0 0.0
    %649 = vmatprep.subr.mxu0 0.0
    %650 = vmatpush1.msra.mxu0 0.0
    %651 = vmatprep.subr.mxu0 0.0
    %652 = vmatpush1.msra.mxu0 0.0
    %653 = vmatprep.subr.mxu0 0.0
    %654 = vmatpush1.msra.mxu0 0.0
    %655 = vmatprep.mubr.f32.mxu0 0.0
    %656 = vmatmul.mubr.f32.gmra.mrb[0].mxu0 %v589
    %v657 = vpop.f32.mrb[0].mxu0
    %v658 = vadd.f32 0.0, %v657
    %v659 = vpop.f32.mrb[0].mxu0
    %660 = vdwg.mxu0
    %v661 = vadd.f32 %v583, %v658
    %v662 = vtanh.pop %v661
    %663 = vst.msk [vmem:[#allocation3 + $0x28] sm:$0xff] %vm169, %v662
    %v664 = vld [vmem:[#allocation2 + $0x30] sm:$0xff]
    %v665 = vld [vmem:[%s2] sm:$0xff]
    %v666 = vld [vmem:[%s2 + $0x8] sm:$0xff]
    %v667 = vld [vmem:[%s2 + $0x10] sm:$0xff]
    %v668 = vld [vmem:[%s2 + $0x18] sm:$0xff]
    %v670 = vsel %vm169, %v662, 0
    %672 = vmatprep.subr.mxu0 0.0
    %673 = vmatpush1.msra.mxu0 %v665
    %674 = vmatprep.subr.mxu0 0.0
    %675 = vmatpush1.msra.mxu0 %v666
    %676 = vmatprep.subr.mxu0 0.0
    %677 = vmatpush1.msra.mxu0 %v667
    %678 = vmatprep.subr.mxu0 0.0
    %679 = vmatpush1.msra.mxu0 %v668
    %680 = vmatprep.subr.mxu0 0.0
    %681 = vmatpush1.msra.mxu0 0.0
    %682 = vmatprep.subr.mxu0 0.0
    %683 = vmatpush1.msra.mxu0 0.0
    %684 = vmatprep.subr.mxu0 0.0
    %685 = vmatpush1.msra.mxu0 0.0
    %686 = vmatprep.subr.mxu0 0.0
    %687 = vmatpush1.msra.mxu0 0.0
    %688 = vmatprep.subr.mxu0 0.0
    %689 = vmatpush1.msra.mxu0 0.0
    %690 = vmatprep.subr.mxu0 0.0
    %691 = vmatpush1.msra.mxu0 0.0
    %692 = vmatprep.subr.mxu0 0.0
    %693 = vmatpush1.msra.mxu0 0.0
    %694 = vmatprep.subr.mxu0 0.0
    %695 = vmatpush1.msra.mxu0 0.0
    %696 = vmatprep.subr.mxu0 0.0
    %697 = vmatpush1.msra.mxu0 0.0
    %698 = vmatprep.subr.mxu0 0.0
    %699 = vmatpush1.msra.mxu0 0.0
    %700 = vmatprep.subr.mxu0 0.0
    %701 = vmatpush1.msra.mxu0 0.0
    %702 = vmatprep.subr.mxu0 0.0
    %703 = vmatpush1.msra.mxu0 0.0
    %704 = vmatprep.subr.mxu0 0.0
    %705 = vmatpush1.msra.mxu0 0.0
    %706 = vmatprep.subr.mxu0 0.0
    %707 = vmatpush1.msra.mxu0 0.0
    %708 = vmatprep.subr.mxu0 0.0
    %709 = vmatpush1.msra.mxu0 0.0
    %710 = vmatprep.subr.mxu0 0.0
    %711 = vmatpush1.msra.mxu0 0.0
    %712 = vmatprep.subr.mxu0 0.0
    %713 = vmatpush1.msra.mxu0 0.0
    %714 = vmatprep.subr.mxu0 0.0
    %715 = vmatpush1.msra.mxu0 0.0
    %716 = vmatprep.subr.mxu0 0.0
    %717 = vmatpush1.msra.mxu0 0.0
    %718 = vmatprep.subr.mxu0 0.0
    %719 = vmatpush1.msra.mxu0 0.0
    %720 = vmatprep.subr.mxu0 0.0
    %721 = vmatpush1.msra.mxu0 0.0
    %722 = vmatprep.subr.mxu0 0.0
    %723 = vmatpush1.msra.mxu0 0.0
    %724 = vmatprep.subr.mxu0 0.0
    %725 = vmatpush1.msra.mxu0 0.0
    %726 = vmatprep.subr.mxu0 0.0
    %727 = vmatpush1.msra.mxu0 0.0
    %728 = vmatprep.subr.mxu0 0.0
    %729 = vmatpush1.msra.mxu0 0.0
    %730 = vmatprep.subr.mxu0 0.0
    %731 = vmatpush1.msra.mxu0 0.0
    %732 = vmatprep.subr.mxu0 0.0
    %733 = vmatpush1.msra.mxu0 0.0
    %734 = vmatprep.subr.mxu0 0.0
    %735 = vmatpush1.msra.mxu0 0.0
    %736 = vmatprep.mubr.f32.mxu0 0.0
    %737 = vmatmul.mubr.f32.gmra.mrb[0].mxu0 %v670
    %v738 = vpop.f32.mrb[0].mxu0
    %v739 = vadd.f32 0.0, %v738
    %v740 = vpop.f32.mrb[0].mxu0
    %741 = vdwg.mxu0
    %v742 = vadd.f32 %v664, %v739
    %v743 = vtanh.pop %v742
    %744 = vst.msk [vmem:[#allocation3 + $0x30] sm:$0xff] %vm169, %v743
    %v745 = vld [vmem:[#allocation2 + $0x38] sm:$0xff]
    %v746 = vld [vmem:[%s2] sm:$0xff]
    %v747 = vld [vmem:[%s2 + $0x8] sm:$0xff]
    %v748 = vld [vmem:[%s2 + $0x10] sm:$0xff]
    %v749 = vld [vmem:[%s2 + $0x18] sm:$0xff]
    %v751 = vsel %vm169, %v743, 0
    %753 = vmatprep.subr.mxu0 0.0
    %754 = vmatpush1.msra.mxu0 %v746
    %755 = vmatprep.subr.mxu0 0.0
    %756 = vmatpush1.msra.mxu0 %v747
    %757 = vmatprep.subr.mxu0 0.0
    %758 = vmatpush1.msra.mxu0 %v748
    %759 = vmatprep.subr.mxu0 0.0
    %760 = vmatpush1.msra.mxu0 %v749
    %761 = vmatprep.subr.mxu0 0.0
    %762 = vmatpush1.msra.mxu0 0.0
    %763 = vmatprep.subr.mxu0 0.0
    %764 = vmatpush1.msra.mxu0 0.0
    %765 = vmatprep.subr.mxu0 0.0
    %766 = vmatpush1.msra.mxu0 0.0
    %767 = vmatprep.subr.mxu0 0.0
    %768 = vmatpush1.msra.mxu0 0.0
    %769 = vmatprep.subr.mxu0 0.0
    %770 = vmatpush1.msra.mxu0 0.0
    %771 = vmatprep.subr.mxu0 0.0
    %772 = vmatpush1.msra.mxu0 0.0
    %773 = vmatprep.subr.mxu0 0.0
    %774 = vmatpush1.msra.mxu0 0.0
    %775 = vmatprep.subr.mxu0 0.0
    %776 = vmatpush1.msra.mxu0 0.0
    %777 = vmatprep.subr.mxu0 0.0
    %778 = vmatpush1.msra.mxu0 0.0
    %779 = vmatprep.subr.mxu0 0.0
    %780 = vmatpush1.msra.mxu0 0.0
    %781 = vmatprep.subr.mxu0 0.0
    %782 = vmatpush1.msra.mxu0 0.0
    %783 = vmatprep.subr.mxu0 0.0
    %784 = vmatpush1.msra.mxu0 0.0
    %785 = vmatprep.subr.mxu0 0.0
    %786 = vmatpush1.msra.mxu0 0.0
    %787 = vmatprep.subr.mxu0 0.0
    %788 = vmatpush1.msra.mxu0 0.0
    %789 = vmatprep.subr.mxu0 0.0
    %790 = vmatpush1.msra.mxu0 0.0
    %791 = vmatprep.subr.mxu0 0.0
    %792 = vmatpush1.msra.mxu0 0.0
    %793 = vmatprep.subr.mxu0 0.0
    %794 = vmatpush1.msra.mxu0 0.0
    %795 = vmatprep.subr.mxu0 0.0
    %796 = vmatpush1.msra.mxu0 0.0
    %797 = vmatprep.subr.mxu0 0.0
    %798 = vmatpush1.msra.mxu0 0.0
    %799 = vmatprep.subr.mxu0 0.0
    %800 = vmatpush1.msra.mxu0 0.0
    %801 = vmatprep.subr.mxu0 0.0
    %802 = vmatpush1.msra.mxu0 0.0
    %803 = vmatprep.subr.mxu0 0.0
    %804 = vmatpush1.msra.mxu0 0.0
    %805 = vmatprep.subr.mxu0 0.0
    %806 = vmatpush1.msra.mxu0 0.0
    %807 = vmatprep.subr.mxu0 0.0
    %808 = vmatpush1.msra.mxu0 0.0
    %809 = vmatprep.subr.mxu0 0.0
    %810 = vmatpush1.msra.mxu0 0.0
    %811 = vmatprep.subr.mxu0 0.0
    %812 = vmatpush1.msra.mxu0 0.0
    %813 = vmatprep.subr.mxu0 0.0
    %814 = vmatpush1.msra.mxu0 0.0
    %815 = vmatprep.subr.mxu0 0.0
    %816 = vmatpush1.msra.mxu0 0.0
    %817 = vmatprep.mubr.f32.mxu0 0.0
    %818 = vmatmul.mubr.f32.gmra.mrb[0].mxu0 %v751
    %v819 = vpop.f32.mrb[0].mxu0
    %v820 = vadd.f32 0.0, %v819
    %v821 = vpop.f32.mrb[0].mxu0
    %822 = vdwg.mxu0
    %v823 = vadd.f32 %v745, %v820
    %v824 = vtanh.pop %v823
    %825 = vst.msk [vmem:[#allocation3 + $0x38] sm:$0xff] %vm169, %v824
    %826 = vst.msk [vmem:[#allocation6] sm:$0xff] %vm169, %v824
    %v827 = vld [vmem:[#allocation3] sm:$0xff]
    %v828 = vld [vmem:[#allocation3 + $0x8] sm:$0xff]
    %v829 = vld [vmem:[#allocation3 + $0x10] sm:$0xff]
    %v830 = vld [vmem:[#allocation3 + $0x18] sm:$0xff]
    %v831 = vld [vmem:[#allocation3 + $0x20] sm:$0xff]
    %v832 = vld [vmem:[#allocation3 + $0x28] sm:$0xff]
    %v833 = vld [vmem:[#allocation3 + $0x30] sm:$0xff]
    %v834 = vld [vmem:[#allocation3 + $0x38] sm:$0xff]
    %v835 = vld [vmem:[%s3] sm:$0xff]
    %v836 = vld [vmem:[%s3 + $0x8] sm:$0xff]
    %v837 = vld [vmem:[%s3 + $0x10] sm:$0xff]
    %v838 = vld [vmem:[%s3 + $0x18] sm:$0xff]
    %v839 = vlaneseq
    %v840 = vshrl.u32 %v839, 7
    %v841 = vsub.s32 1, %v840
    %v842 = vrot.slane %v24, %v841
    %v844 = vsel %vm169, %v827, 0
    %v847 = vsel %vm169, %v828, 0
    %v850 = vsel %vm169, %v829, 0
    %v853 = vsel %vm169, %v830, 0
    %v856 = vsel %vm169, %v831, 0
    %v859 = vsel %vm169, %v832, 0
    %v862 = vsel %vm169, %v833, 0
    %v865 = vsel %vm169, %v834, 0
    %867 = vmatprep.subr.mxu0 0.0
    %868 = vmatpush1.msra.mxu0 %v835
    %869 = vmatprep.subr.mxu0 0.0
    %870 = vmatpush1.msra.mxu0 %v836
    %871 = vmatprep.subr.mxu0 0.0
    %872 = vmatpush1.msra.mxu0 %v837
    %873 = vmatprep.subr.mxu0 0.0
    %874 = vmatpush1.msra.mxu0 %v838
    %875 = vmatprep.subr.mxu0 0.0
    %876 = vmatpush1.msra.mxu0 0.0
    %877 = vmatprep.subr.mxu0 0.0
    %878 = vmatpush1.msra.mxu0 0.0
    %879 = vmatprep.subr.mxu0 0.0
    %880 = vmatpush1.msra.mxu0 0.0
    %881 = vmatprep.subr.mxu0 0.0
    %882 = vmatpush1.msra.mxu0 0.0
    %883 = vmatprep.subr.mxu0 0.0
    %884 = vmatpush1.msra.mxu0 0.0
    %885 = vmatprep.subr.mxu0 0.0
    %886 = vmatpush1.msra.mxu0 0.0
    %887 = vmatprep.subr.mxu0 0.0
    %888 = vmatpush1.msra.mxu0 0.0
    %889 = vmatprep.subr.mxu0 0.0
    %890 = vmatpush1.msra.mxu0 0.0
    %891 = vmatprep.subr.mxu0 0.0
    %892 = vmatpush1.msra.mxu0 0.0
    %893 = vmatprep.subr.mxu0 0.0
    %894 = vmatpush1.msra.mxu0 0.0
    %895 = vmatprep.subr.mxu0 0.0
    %896 = vmatpush1.msra.mxu0 0.0
    %897 = vmatprep.subr.mxu0 0.0
    %898 = vmatpush1.msra.mxu0 0.0
    %899 = vmatprep.subr.mxu0 0.0
    %900 = vmatpush1.msra.mxu0 0.0
    %901 = vmatprep.subr.mxu0 0.0
    %902 = vmatpush1.msra.mxu0 0.0
    %903 = vmatprep.subr.mxu0 0.0
    %904 = vmatpush1.msra.mxu0 0.0
    %905 = vmatprep.subr.mxu0 0.0
    %906 = vmatpush1.msra.mxu0 0.0
    %907 = vmatprep.subr.mxu0 0.0
    %908 = vmatpush1.msra.mxu0 0.0
    %909 = vmatprep.subr.mxu0 0.0
    %910 = vmatpush1.msra.mxu0 0.0
    %911 = vmatprep.subr.mxu0 0.0
    %912 = vmatpush1.msra.mxu0 0.0
    %913 = vmatprep.subr.mxu0 0.0
    %914 = vmatpush1.msra.mxu0 0.0
    %915 = vmatprep.subr.mxu0 0.0
    %916 = vmatpush1.msra.mxu0 0.0
    %917 = vmatprep.subr.mxu0 0.0
    %918 = vmatpush1.msra.mxu0 0.0
    %919 = vmatprep.subr.mxu0 0.0
    %920 = vmatpush1.msra.mxu0 0.0
    %921 = vmatprep.subr.mxu0 0.0
    %922 = vmatpush1.msra.mxu0 0.0
    %923 = vmatprep.subr.mxu0 0.0
    %924 = vmatpush1.msra.mxu0 0.0
    %925 = vmatprep.subr.mxu0 0.0
    %926 = vmatpush1.msra.mxu0 0.0
    %927 = vmatprep.subr.mxu0 0.0
    %928 = vmatpush1.msra.mxu0 0.0
    %929 = vmatprep.subr.mxu0 0.0
    %930 = vmatpush1.msra.mxu0 0.0
    %931 = vmatprep.mubr.f32.mxu0 0.0
    %932 = vmatmul.mubr.f32.gmra.mrb[0].mxu0 %v844
    %v933 = vpop.f32.mrb[0].mxu0
    %v934 = vadd.f32 %v842, %v933
    %v935 = vpop.f32.mrb[0].mxu0
    %936 = vmatprep.mubr.f32.mxu0 0.0
    %937 = vmatmul.mubr.f32.gmra.mrb[0].mxu0 %v847
    %v938 = vpop.f32.mrb[0].mxu0
    %v939 = vadd.f32 %v842, %v938
    %v940 = vpop.f32.mrb[0].mxu0
    %941 = vmatprep.mubr.f32.mxu0 0.0
    %942 = vmatmul.mubr.f32.gmra.mrb[0].mxu0 %v850
    %v943 = vpop.f32.mrb[0].mxu0
    %v944 = vadd.f32 %v842, %v943
    %v945 = vpop.f32.mrb[0].mxu0
    %946 = vmatprep.mubr.f32.mxu0 0.0
    %947 = vmatmul.mubr.f32.gmra.mrb[0].mxu0 %v853
    %v948 = vpop.f32.mrb[0].mxu0
    %v949 = vadd.f32 %v842, %v948
    %v950 = vpop.f32.mrb[0].mxu0
    %951 = vmatprep.mubr.f32.mxu0 0.0
    %952 = vmatmul.mubr.f32.gmra.mrb[0].mxu0 %v856
    %v953 = vpop.f32.mrb[0].mxu0
    %v954 = vadd.f32 %v842, %v953
    %v955 = vpop.f32.mrb[0].mxu0
    %956 = vmatprep.mubr.f32.mxu0 0.0
    %957 = vmatmul.mubr.f32.gmra.mrb[0].mxu0 %v859
    %v958 = vpop.f32.mrb[0].mxu0
    %v959 = vadd.f32 %v842, %v958
    %v960 = vpop.f32.mrb[0].mxu0
    %961 = vmatprep.mubr.f32.mxu0 0.0
    %962 = vmatmul.mubr.f32.gmra.mrb[0].mxu0 %v862
    %v963 = vpop.f32.mrb[0].mxu0
    %v964 = vadd.f32 %v842, %v963
    %v965 = vpop.f32.mrb[0].mxu0
    %966 = vmatprep.mubr.f32.mxu0 0.0
    %967 = vmatmul.mubr.f32.gmra.mrb[0].mxu0 %v865
    %v968 = vpop.f32.mrb[0].mxu0
    %v969 = vadd.f32 %v842, %v968
    %v970 = vpop.f32.mrb[0].mxu0
    %971 = vdwg.mxu0
    %972 = vst [vmem:[#allocation4] sm:$0xff] %v934
    %973 = vst [vmem:[#allocation4 + $0x8] sm:$0xff] %v939
    %974 = vst [vmem:[#allocation4 + $0x10] sm:$0xff] %v944
    %975 = vst [vmem:[#allocation4 + $0x18] sm:$0xff] %v949
    %976 = vst [vmem:[#allocation4 + $0x20] sm:$0xff] %v954
    %977 = vst [vmem:[#allocation4 + $0x28] sm:$0xff] %v959
    %978 = vst [vmem:[#allocation4 + $0x30] sm:$0xff] %v964
    %979 = vst [vmem:[#allocation4 + $0x38] sm:$0xff] %v969
    // Predicated region
    $region22: #{tpu_custom_call.1} parent=1 // pred_check
      _
    $region23: #{tpu_custom_call.1} parent=1 // pred_check_branch
      %981 = sbr.rel (0) target = $region25
    $region24: #{tpu_custom_call.1} parent=1 // pred_region
      %s983 = ssub.s32 1024, 1024
      %984 = vsyncadd [#allocation5], %s983
      %s985 = sshll.u32 [#allocation4], 4
      %s986 = int_to_ptr.vmem [resolvable:$true] %s985
      %991 = dma.vmem_to_hbm [thread:$0]  %s986, 1024, %s5, [#allocation5], 128, 128, 8
    $region25: #{tpu_custom_call.1} parent=1 // pred_fallthru
      _
    // Predicated region
    $region26: #{tpu_custom_call.1} parent=1 // pred_check
      _
    $region27: #{tpu_custom_call.1} parent=1 // pred_check_branch
      %993 = sbr.rel (0) target = $region29
    $region28: #{tpu_custom_call.1} parent=1 // pred_region
      %s995 = ssub.s32 128, 128
      %996 = vsyncadd [#allocation7], %s995
      %s998 = sshll.u32 [#allocation6], 4
      %s999 = int_to_ptr.vmem [resolvable:$true] %s998
      %1001 = dma.vmem_to_hbm [thread:$0]  %s999, 128, %s6, [#allocation7]
    $region29: #{tpu_custom_call.1} parent=1 // pred_fallthru
      _
    // Predicated region
    $region30: #{tpu_custom_call.1} parent=1 // pred_check
      _
    $region31: #{tpu_custom_call.1} parent=1 // pred_check_branch
      %1003 = sbr.rel (0) target = $region33
    $region32: #{tpu_custom_call.1} parent=1 // pred_region
      %1004 = dma.done [#allocation5], 1024
    $region33: #{tpu_custom_call.1} parent=1 // pred_fallthru
      _
    // Predicated region
    $region34: #{tpu_custom_call.1} parent=1 // pred_check
      _
    $region35: #{tpu_custom_call.1} parent=1 // pred_check_branch
      %1006 = sbr.rel (0) target = $region37
    $region36: #{tpu_custom_call.1} parent=1 // pred_region
      %1007 = dma.done [#allocation7], 128
    $region37: #{tpu_custom_call.1} parent=1 // pred_fallthru
      _
    %1008 = vsyncpa [#allocation5], 1
    %1009 = vsyncpa [#allocation7], 1

</llo_original>
